<compile_context>
chip_gen: v6e
topology: v6e:2x2x1
jax: 0.10.0
libtpu: 0.0.40
codegen_flags: <defaults>
</compile_context>

<pallas_src>
from functools import partial

import jax
import jax.numpy as jnp
import numpy as np
from jax import lax
from jax.experimental import pallas as pl
from jax.experimental.pallas import tpu as pltpu


# ----------------------------------------------------------- shared recurrence ---
def _lstm_steps(x2d, wih_t, whh_t, bias, B, T, H):
    """x2d: (B*T, F) batch-first flattened.  Returns list of per-step h, each (B, H)."""
    # One batched input projection for all timesteps (off the serial path).
    pre = jnp.dot(x2d, wih_t, preferred_element_type=jnp.float32) + bias   # (B*T, 4H)
    pre = pre.reshape(B, T, 4 * H)                                         # tile-aligned split

    h = jnp.zeros((B, H), jnp.float32)
    c = jnp.zeros((B, H), jnp.float32)
    # TODO(synk): `sequential=True` in the PyTorch module reuses the previous call's
    # hidden state (Python-side module state); pass a prior h as an extra input if needed.

    hs = []
    for t in range(T):                       # fully unrolled: T is tiny and static
        gates = pre[:, t, :] + jnp.dot(h, whh_t, preferred_element_type=jnp.float32)
        i = jax.nn.sigmoid(gates[:, 0 * H:1 * H])
        f = jax.nn.sigmoid(gates[:, 1 * H:2 * H])
        g = jnp.tanh(gates[:, 2 * H:3 * H])
        o = jax.nn.sigmoid(gates[:, 3 * H:4 * H])
        c = f * c + i * g
        h = o * jnp.tanh(c)
        hs.append(h)
    return hs


# -------------------------------------------------------------------- kernels ---
def _lstm_last_kernel(x2d_ref, wih_t_ref, whh_t_ref, b_ref, out_ref):
    # out_ref: (B, H) — only the final hidden state (return_sequence=False path).
    B, H = out_ref.shape
    T = x2d_ref.shape[0] // B
    hs = _lstm_steps(x2d_ref[...], wih_t_ref[...], whh_t_ref[...], b_ref[...], B, T, H)
    out_ref[...] = hs[-1].astype(out_ref.dtype)


def _lstm_seq_kernel(x2d_ref, wih_t_ref, whh_t_ref, b_ref, seq_ref):
    # seq_ref: (T, B, H) — full hidden-state sequence (return_sequence=True path).
    T, B, H = seq_ref.shape
    hs = _lstm_steps(x2d_ref[...], wih_t_ref[...], whh_t_ref[...], b_ref[...], B, T, H)
    for t in range(T):                       # static-address stores
        seq_ref[t] = hs[t].astype(seq_ref.dtype)


# ------------------------------------------------------------- param packing ---
def pack_lstm_params(w_ih, w_hh, b_ih, b_hh):
    """One-time host-side packing (hoists all layout work out of the per-call path)."""
    wih_t = np.ascontiguousarray(np.asarray(w_ih, np.float32).T)           # (F, 4H)
    whh_t = np.ascontiguousarray(np.asarray(w_hh, np.float32).T)           # (H, 4H)
    bias = (np.asarray(b_ih, np.float32) + np.asarray(b_hh, np.float32)).reshape(1, -1)
    return jnp.asarray(wih_t), jnp.asarray(whh_t), jnp.asarray(bias)


# ------------------------------------------------------------------- wrapper ---
@partial(jax.jit, static_argnames=("return_sequence",))
def keras_like_lstm(x, wih_t, whh_t, bias, *, return_sequence=False):
    """x: (B, T, F) batch_first, like the PyTorch module.  Params pre-packed via
    pack_lstm_params.  Returns (B, T, H) if return_sequence else (B, H) (== out[:, -1])."""
    B, T, F = x.shape
    H = whh_t.shape[0]

    x2d = x.reshape(B * T, F).astype(jnp.float32)       # free reshape — no transpose

    in_specs = [
        pl.BlockSpec((B * T, F), lambda i: (0, 0)),
        pl.BlockSpec((F, 4 * H), lambda i: (0, 0)),
        pl.BlockSpec((H, 4 * H), lambda i: (0, 0)),
        pl.BlockSpec((1, 4 * H), lambda i: (0, 0)),
    ]
    cparams = pltpu.CompilerParams(dimension_semantics=("arbitrary",))

    if return_sequence:
        seq = pl.pallas_call(
            _lstm_seq_kernel,
            out_shape=jax.ShapeDtypeStruct((T, B, H), jnp.float32),
            grid_spec=pltpu.PrefetchScalarGridSpec(
                num_scalar_prefetch=0,
                grid=(1,),
                in_specs=in_specs,
                out_specs=pl.BlockSpec((T, B, H), lambda i: (0, 0, 0)),
            ),
            compiler_params=cparams,
        )(x2d, wih_t, whh_t, bias)                       # (T, B, H)
        return jnp.swapaxes(seq, 0, 1)                   # (B, T, H)

    return pl.pallas_call(
        _lstm_last_kernel,
        out_shape=jax.ShapeDtypeStruct((B, H), jnp.float32),
        grid_spec=pltpu.PrefetchScalarGridSpec(
            num_scalar_prefetch=0,
            grid=(1,),
            in_specs=in_specs,
            out_specs=pl.BlockSpec((B, H), lambda i: (0, 0)),
        ),
        compiler_params=cparams,
    )(x2d, wih_t, whh_t, bias)                           # (B, H)


# --------------------------------------------------------- pure-JAX reference ---
def _lstm_ref(x, w_ih, w_hh, b_ih, b_hh):
    B, T, F = x.shape
    H = w_hh.shape[1]

    def step(carry, x_t):
        h, c = carry
        gates = x_t @ w_ih.T + h @ w_hh.T + b_ih + b_hh
        i, f, g, o = jnp.split(gates, 4, axis=-1)
        i, f, o = jax.nn.sigmoid(i), jax.nn.sigmoid(f), jax.nn.sigmoid(o)
        g = jnp.tanh(g)
        c = f * c + i * g
        h = o * jnp.tanh(c)
        return (h, c), h

    init = (jnp.zeros((B, H), jnp.float32), jnp.zeros((B, H), jnp.float32))
    _, seq = lax.scan(step, init, jnp.swapaxes(x, 0, 1))
    return jnp.swapaxes(seq, 0, 1)                       # (B, T, H)


# ----------------------------------------------------------------------- main ---
if __name__ == "__main__":
    # Module config: KerasLikeLSTM(input_shape=(timesteps=8, features=4), output=32)
    B, T, F, H = 2, 8, 4, 32

    key = jax.random.PRNGKey(0)
    kx, k1, k2, k3, k4 = jax.random.split(key, 5)

    x = jax.random.normal(kx, (B, T, F), dtype=jnp.float32)     # batch_first input

    # Deterministic parameter init, matching PyTorch nn.LSTM default U(-k, k), k=1/sqrt(H)
    k = 1.0 / np.sqrt(H)
    w_ih = jax.random.uniform(k1, (4 * H, F), jnp.float32, -k, k)
    w_hh = jax.random.uniform(k2, (4 * H, H), jnp.float32, -k, k)
    b_ih = jax.random.uniform(k3, (4 * H,), jnp.float32, -k, k)
    b_hh = jax.random.uniform(k4, (4 * H,), jnp.float32, -k, k)

    wih_t, whh_t, bias = pack_lstm_params(w_ih, w_hh, b_ih, b_hh)   # packed once

    # Default path: return_sequence=False → (B, H)
    out_last = keras_like_lstm(x, wih_t, whh_t, bias, return_sequence=False)
    out_last = jax.block_until_ready(out_last)

    # Sequence path: return_sequence=True → (B, T, H)
    out_seq = keras_like_lstm(x, wih_t, whh_t, bias, return_sequence=True)
    out_seq = jax.block_until_ready(out_seq)

    ref_seq = _lstm_ref(x, w_ih, w_hh, b_ih, b_hh)
    np.testing.assert_allclose(np.asarray(out_last), np.asarray(ref_seq[:, -1]),
                               rtol=1e-5, atol=1e-5)
    np.testing.assert_allclose(np.asarray(out_seq), np.asarray(ref_seq),
                               rtol=1e-5, atol=1e-5)

    print("KERNEL_OK")
</pallas_src>

<mosaic_0001>
module attributes {stable_mosaic.version = 11 : i64} {
  func.func @_lstm_last_kernel(%arg0: i32, %arg1: memref<16x4xf32, #tpu.memory_space<vmem>>, %arg2: memref<4x128xf32, #tpu.memory_space<vmem>>, %arg3: memref<32x128xf32, #tpu.memory_space<vmem>>, %arg4: memref<1x128xf32, #tpu.memory_space<vmem>>, %arg5: memref<2x32xf32, #tpu.memory_space<vmem>>) attributes {dimension_semantics = [#tpu.dimension_semantics<arbitrary>], iteration_bounds = array<i64: 1>, scalar_prefetch = 0 : i64, scratch_operands = 0 : i64, tpu.core_type = #tpu.core_type<tc>, window_params = [{pipeline_mode = #tpu.pipeline_mode<synchronous>, transform_indices = @transform_0, window_bounds = array<i64: 16, 4>}, {pipeline_mode = #tpu.pipeline_mode<synchronous>, transform_indices = @transform_1, window_bounds = array<i64: 4, 128>}, {pipeline_mode = #tpu.pipeline_mode<synchronous>, transform_indices = @transform_2, window_bounds = array<i64: 32, 128>}, {pipeline_mode = #tpu.pipeline_mode<synchronous>, transform_indices = @transform_3, window_bounds = array<i64: 1, 128>}, {pipeline_mode = #tpu.pipeline_mode<synchronous>, transform_indices = @transform_4, window_bounds = array<i64: 2, 32>}]} {
    %c0 = arith.constant 0 : index
    %c0_0 = arith.constant 0 : index
    %0 = vector.load %arg1[%c0, %c0_0] : memref<16x4xf32, #tpu.memory_space<vmem>>, vector<16x4xf32>
    %c0_1 = arith.constant 0 : index
    %c0_2 = arith.constant 0 : index
    %1 = vector.load %arg2[%c0_1, %c0_2] : memref<4x128xf32, #tpu.memory_space<vmem>>, vector<4x128xf32>
    %c0_3 = arith.constant 0 : index
    %c0_4 = arith.constant 0 : index
    %2 = vector.load %arg3[%c0_3, %c0_4] : memref<32x128xf32, #tpu.memory_space<vmem>>, vector<32x128xf32>
    %c0_5 = arith.constant 0 : index
    %c0_6 = arith.constant 0 : index
    %3 = vector.load %arg4[%c0_5, %c0_6] : memref<1x128xf32, #tpu.memory_space<vmem>>, vector<1x128xf32>
    %cst = arith.constant dense<0.000000e+00> : vector<16x128xf32>
    %4 = tpu.matmul %0, %1, %cst {dimension_numbers = #tpu.dot_dimension_numbers<[1], [0], [0], [1], [0, 0, 1, 1], [], []>} : vector<16x4xf32>, vector<4x128xf32>, vector<16x128xf32> -> vector<16x128xf32>
    %5 = vector.broadcast %3 : vector<1x128xf32> to vector<16x128xf32>
    %6 = arith.addf %4, %5 : vector<16x128xf32>
    %7 = vector.shape_cast %6 : vector<16x128xf32> to vector<2x8x128xf32>
    %cst_7 = arith.constant 0.000000e+00 : f32
    %8 = vector.broadcast %cst_7 : f32 to vector<2x32xf32>
    %cst_8 = arith.constant 0.000000e+00 : f32
    %9 = vector.broadcast %cst_8 : f32 to vector<2x32xf32>
    %10 = vector.extract_strided_slice %7 {offsets = [0, 0, 0], sizes = [2, 1, 128], strides = [1, 1, 1]} : vector<2x8x128xf32> to vector<2x1x128xf32>
    %11 = vector.shape_cast %10 : vector<2x1x128xf32> to vector<2x128xf32>
    %cst_9 = arith.constant dense<0.000000e+00> : vector<2x128xf32>
    %12 = tpu.matmul %8, %2, %cst_9 {dimension_numbers = #tpu.dot_dimension_numbers<[1], [0], [0], [1], [0, 0, 1, 1], [], []>} : vector<2x32xf32>, vector<32x128xf32>, vector<2x128xf32> -> vector<2x128xf32>
    %13 = arith.addf %11, %12 : vector<2x128xf32>
    %14 = vector.extract_strided_slice %13 {offsets = [0, 0], sizes = [2, 32], strides = [1, 1]} : vector<2x128xf32> to vector<2x32xf32>
    %15 = arith.negf %14 : vector<2x32xf32>
    %16 = math.exp %15 : vector<2x32xf32>
    %cst_10 = arith.constant 1.000000e+00 : f32
    %17 = vector.broadcast %cst_10 : f32 to vector<2x32xf32>
    %18 = arith.addf %17, %16 : vector<2x32xf32>
    %19 = arith.divf %17, %18 : vector<2x32xf32>
    %20 = vector.extract_strided_slice %13 {offsets = [0, 32], sizes = [2, 32], strides = [1, 1]} : vector<2x128xf32> to vector<2x32xf32>
    %21 = arith.negf %20 : vector<2x32xf32>
    %22 = math.exp %21 : vector<2x32xf32>
    %cst_11 = arith.constant 1.000000e+00 : f32
    %23 = vector.broadcast %cst_11 : f32 to vector<2x32xf32>
    %24 = arith.addf %23, %22 : vector<2x32xf32>
    %25 = arith.divf %23, %24 : vector<2x32xf32>
    %26 = vector.extract_strided_slice %13 {offsets = [0, 64], sizes = [2, 32], strides = [1, 1]} : vector<2x128xf32> to vector<2x32xf32>
    %27 = math.tanh %26 : vector<2x32xf32>
    %28 = vector.extract_strided_slice %13 {offsets = [0, 96], sizes = [2, 32], strides = [1, 1]} : vector<2x128xf32> to vector<2x32xf32>
    %29 = arith.negf %28 : vector<2x32xf32>
    %30 = math.exp %29 : vector<2x32xf32>
    %cst_12 = arith.constant 1.000000e+00 : f32
    %31 = vector.broadcast %cst_12 : f32 to vector<2x32xf32>
    %32 = arith.addf %31, %30 : vector<2x32xf32>
    %33 = arith.divf %31, %32 : vector<2x32xf32>
    %34 = arith.mulf %25, %9 : vector<2x32xf32>
    %35 = arith.mulf %19, %27 : vector<2x32xf32>
    %36 = arith.addf %34, %35 : vector<2x32xf32>
    %37 = math.tanh %36 : vector<2x32xf32>
    %38 = arith.mulf %33, %37 : vector<2x32xf32>
    %39 = vector.extract_strided_slice %7 {offsets = [0, 1, 0], sizes = [2, 1, 128], strides = [1, 1, 1]} : vector<2x8x128xf32> to vector<2x1x128xf32>
    %40 = vector.shape_cast %39 : vector<2x1x128xf32> to vector<2x128xf32>
    %cst_13 = arith.constant dense<0.000000e+00> : vector<2x128xf32>
    %41 = tpu.matmul %38, %2, %cst_13 {dimension_numbers = #tpu.dot_dimension_numbers<[1], [0], [0], [1], [0, 0, 1, 1], [], []>} : vector<2x32xf32>, vector<32x128xf32>, vector<2x128xf32> -> vector<2x128xf32>
    %42 = arith.addf %40, %41 : vector<2x128xf32>
    %43 = vector.extract_strided_slice %42 {offsets = [0, 0], sizes = [2, 32], strides = [1, 1]} : vector<2x128xf32> to vector<2x32xf32>
    %44 = arith.negf %43 : vector<2x32xf32>
    %45 = math.exp %44 : vector<2x32xf32>
    %cst_14 = arith.constant 1.000000e+00 : f32
    %46 = vector.broadcast %cst_14 : f32 to vector<2x32xf32>
    %47 = arith.addf %46, %45 : vector<2x32xf32>
    %48 = arith.divf %46, %47 : vector<2x32xf32>
    %49 = vector.extract_strided_slice %42 {offsets = [0, 32], sizes = [2, 32], strides = [1, 1]} : vector<2x128xf32> to vector<2x32xf32>
    %50 = arith.negf %49 : vector<2x32xf32>
    %51 = math.exp %50 : vector<2x32xf32>
    %cst_15 = arith.constant 1.000000e+00 : f32
    %52 = vector.broadcast %cst_15 : f32 to vector<2x32xf32>
    %53 = arith.addf %52, %51 : vector<2x32xf32>
    %54 = arith.divf %52, %53 : vector<2x32xf32>
    %55 = vector.extract_strided_slice %42 {offsets = [0, 64], sizes = [2, 32], strides = [1, 1]} : vector<2x128xf32> to vector<2x32xf32>
    %56 = math.tanh %55 : vector<2x32xf32>
    %57 = vector.extract_strided_slice %42 {offsets = [0, 96], sizes = [2, 32], strides = [1, 1]} : vector<2x128xf32> to vector<2x32xf32>
    %58 = arith.negf %57 : vector<2x32xf32>
    %59 = math.exp %58 : vector<2x32xf32>
    %cst_16 = arith.constant 1.000000e+00 : f32
    %60 = vector.broadcast %cst_16 : f32 to vector<2x32xf32>
    %61 = arith.addf %60, %59 : vector<2x32xf32>
    %62 = arith.divf %60, %61 : vector<2x32xf32>
    %63 = arith.mulf %54, %36 : vector<2x32xf32>
    %64 = arith.mulf %48, %56 : vector<2x32xf32>
    %65 = arith.addf %63, %64 : vector<2x32xf32>
    %66 = math.tanh %65 : vector<2x32xf32>
    %67 = arith.mulf %62, %66 : vector<2x32xf32>
    %68 = vector.extract_strided_slice %7 {offsets = [0, 2, 0], sizes = [2, 1, 128], strides = [1, 1, 1]} : vector<2x8x128xf32> to vector<2x1x128xf32>
    %69 = vector.shape_cast %68 : vector<2x1x128xf32> to vector<2x128xf32>
    %cst_17 = arith.constant dense<0.000000e+00> : vector<2x128xf32>
    %70 = tpu.matmul %67, %2, %cst_17 {dimension_numbers = #tpu.dot_dimension_numbers<[1], [0], [0], [1], [0, 0, 1, 1], [], []>} : vector<2x32xf32>, vector<32x128xf32>, vector<2x128xf32> -> vector<2x128xf32>
    %71 = arith.addf %69, %70 : vector<2x128xf32>
    %72 = vector.extract_strided_slice %71 {offsets = [0, 0], sizes = [2, 32], strides = [1, 1]} : vector<2x128xf32> to vector<2x32xf32>
    %73 = arith.negf %72 : vector<2x32xf32>
    %74 = math.exp %73 : vector<2x32xf32>
    %cst_18 = arith.constant 1.000000e+00 : f32
    %75 = vector.broadcast %cst_18 : f32 to vector<2x32xf32>
    %76 = arith.addf %75, %74 : vector<2x32xf32>
    %77 = arith.divf %75, %76 : vector<2x32xf32>
    %78 = vector.extract_strided_slice %71 {offsets = [0, 32], sizes = [2, 32], strides = [1, 1]} : vector<2x128xf32> to vector<2x32xf32>
    %79 = arith.negf %78 : vector<2x32xf32>
    %80 = math.exp %79 : vector<2x32xf32>
    %cst_19 = arith.constant 1.000000e+00 : f32
    %81 = vector.broadcast %cst_19 : f32 to vector<2x32xf32>
    %82 = arith.addf %81, %80 : vector<2x32xf32>
    %83 = arith.divf %81, %82 : vector<2x32xf32>
    %84 = vector.extract_strided_slice %71 {offsets = [0, 64], sizes = [2, 32], strides = [1, 1]} : vector<2x128xf32> to vector<2x32xf32>
    %85 = math.tanh %84 : vector<2x32xf32>
    %86 = vector.extract_strided_slice %71 {offsets = [0, 96], sizes = [2, 32], strides = [1, 1]} : vector<2x128xf32> to vector<2x32xf32>
    %87 = arith.negf %86 : vector<2x32xf32>
    %88 = math.exp %87 : vector<2x32xf32>
    %cst_20 = arith.constant 1.000000e+00 : f32
    %89 = vector.broadcast %cst_20 : f32 to vector<2x32xf32>
    %90 = arith.addf %89, %88 : vector<2x32xf32>
    %91 = arith.divf %89, %90 : vector<2x32xf32>
    %92 = arith.mulf %83, %65 : vector<2x32xf32>
    %93 = arith.mulf %77, %85 : vector<2x32xf32>
    %94 = arith.addf %92, %93 : vector<2x32xf32>
    %95 = math.tanh %94 : vector<2x32xf32>
    %96 = arith.mulf %91, %95 : vector<2x32xf32>
    %97 = vector.extract_strided_slice %7 {offsets = [0, 3, 0], sizes = [2, 1, 128], strides = [1, 1, 1]} : vector<2x8x128xf32> to vector<2x1x128xf32>
    %98 = vector.shape_cast %97 : vector<2x1x128xf32> to vector<2x128xf32>
    %cst_21 = arith.constant dense<0.000000e+00> : vector<2x128xf32>
    %99 = tpu.matmul %96, %2, %cst_21 {dimension_numbers = #tpu.dot_dimension_numbers<[1], [0], [0], [1], [0, 0, 1, 1], [], []>} : vector<2x32xf32>, vector<32x128xf32>, vector<2x128xf32> -> vector<2x128xf32>
    %100 = arith.addf %98, %99 : vector<2x128xf32>
    %101 = vector.extract_strided_slice %100 {offsets = [0, 0], sizes = [2, 32], strides = [1, 1]} : vector<2x128xf32> to vector<2x32xf32>
    %102 = arith.negf %101 : vector<2x32xf32>
    %103 = math.exp %102 : vector<2x32xf32>
    %cst_22 = arith.constant 1.000000e+00 : f32
    %104 = vector.broadcast %cst_22 : f32 to vector<2x32xf32>
    %105 = arith.addf %104, %103 : vector<2x32xf32>
    %106 = arith.divf %104, %105 : vector<2x32xf32>
    %107 = vector.extract_strided_slice %100 {offsets = [0, 32], sizes = [2, 32], strides = [1, 1]} : vector<2x128xf32> to vector<2x32xf32>
    %108 = arith.negf %107 : vector<2x32xf32>
    %109 = math.exp %108 : vector<2x32xf32>
    %cst_23 = arith.constant 1.000000e+00 : f32
    %110 = vector.broadcast %cst_23 : f32 to vector<2x32xf32>
    %111 = arith.addf %110, %109 : vector<2x32xf32>
    %112 = arith.divf %110, %111 : vector<2x32xf32>
    %113 = vector.extract_strided_slice %100 {offsets = [0, 64], sizes = [2, 32], strides = [1, 1]} : vector<2x128xf32> to vector<2x32xf32>
    %114 = math.tanh %113 : vector<2x32xf32>
    %115 = vector.extract_strided_slice %100 {offsets = [0, 96], sizes = [2, 32], strides = [1, 1]} : vector<2x128xf32> to vector<2x32xf32>
    %116 = arith.negf %115 : vector<2x32xf32>
    %117 = math.exp %116 : vector<2x32xf32>
    %cst_24 = arith.constant 1.000000e+00 : f32
    %118 = vector.broadcast %cst_24 : f32 to vector<2x32xf32>
    %119 = arith.addf %118, %117 : vector<2x32xf32>
    %120 = arith.divf %118, %119 : vector<2x32xf32>
    %121 = arith.mulf %112, %94 : vector<2x32xf32>
    %122 = arith.mulf %106, %114 : vector<2x32xf32>
    %123 = arith.addf %121, %122 : vector<2x32xf32>
    %124 = math.tanh %123 : vector<2x32xf32>
    %125 = arith.mulf %120, %124 : vector<2x32xf32>
    %126 = vector.extract_strided_slice %7 {offsets = [0, 4, 0], sizes = [2, 1, 128], strides = [1, 1, 1]} : vector<2x8x128xf32> to vector<2x1x128xf32>
    %127 = vector.shape_cast %126 : vector<2x1x128xf32> to vector<2x128xf32>
    %cst_25 = arith.constant dense<0.000000e+00> : vector<2x128xf32>
    %128 = tpu.matmul %125, %2, %cst_25 {dimension_numbers = #tpu.dot_dimension_numbers<[1], [0], [0], [1], [0, 0, 1, 1], [], []>} : vector<2x32xf32>, vector<32x128xf32>, vector<2x128xf32> -> vector<2x128xf32>
    %129 = arith.addf %127, %128 : vector<2x128xf32>
    %130 = vector.extract_strided_slice %129 {offsets = [0, 0], sizes = [2, 32], strides = [1, 1]} : vector<2x128xf32> to vector<2x32xf32>
    %131 = arith.negf %130 : vector<2x32xf32>
    %132 = math.exp %131 : vector<2x32xf32>
    %cst_26 = arith.constant 1.000000e+00 : f32
    %133 = vector.broadcast %cst_26 : f32 to vector<2x32xf32>
    %134 = arith.addf %133, %132 : vector<2x32xf32>
    %135 = arith.divf %133, %134 : vector<2x32xf32>
    %136 = vector.extract_strided_slice %129 {offsets = [0, 32], sizes = [2, 32], strides = [1, 1]} : vector<2x128xf32> to vector<2x32xf32>
    %137 = arith.negf %136 : vector<2x32xf32>
    %138 = math.exp %137 : vector<2x32xf32>
    %cst_27 = arith.constant 1.000000e+00 : f32
    %139 = vector.broadcast %cst_27 : f32 to vector<2x32xf32>
    %140 = arith.addf %139, %138 : vector<2x32xf32>
    %141 = arith.divf %139, %140 : vector<2x32xf32>
    %142 = vector.extract_strided_slice %129 {offsets = [0, 64], sizes = [2, 32], strides = [1, 1]} : vector<2x128xf32> to vector<2x32xf32>
    %143 = math.tanh %142 : vector<2x32xf32>
    %144 = vector.extract_strided_slice %129 {offsets = [0, 96], sizes = [2, 32], strides = [1, 1]} : vector<2x128xf32> to vector<2x32xf32>
    %145 = arith.negf %144 : vector<2x32xf32>
    %146 = math.exp %145 : vector<2x32xf32>
    %cst_28 = arith.constant 1.000000e+00 : f32
    %147 = vector.broadcast %cst_28 : f32 to vector<2x32xf32>
    %148 = arith.addf %147, %146 : vector<2x32xf32>
    %149 = arith.divf %147, %148 : vector<2x32xf32>
    %150 = arith.mulf %141, %123 : vector<2x32xf32>
    %151 = arith.mulf %135, %143 : vector<2x32xf32>
    %152 = arith.addf %150, %151 : vector<2x32xf32>
    %153 = math.tanh %152 : vector<2x32xf32>
    %154 = arith.mulf %149, %153 : vector<2x32xf32>
    %155 = vector.extract_strided_slice %7 {offsets = [0, 5, 0], sizes = [2, 1, 128], strides = [1, 1, 1]} : vector<2x8x128xf32> to vector<2x1x128xf32>
    %156 = vector.shape_cast %155 : vector<2x1x128xf32> to vector<2x128xf32>
    %cst_29 = arith.constant dense<0.000000e+00> : vector<2x128xf32>
    %157 = tpu.matmul %154, %2, %cst_29 {dimension_numbers = #tpu.dot_dimension_numbers<[1], [0], [0], [1], [0, 0, 1, 1], [], []>} : vector<2x32xf32>, vector<32x128xf32>, vector<2x128xf32> -> vector<2x128xf32>
    %158 = arith.addf %156, %157 : vector<2x128xf32>
    %159 = vector.extract_strided_slice %158 {offsets = [0, 0], sizes = [2, 32], strides = [1, 1]} : vector<2x128xf32> to vector<2x32xf32>
    %160 = arith.negf %159 : vector<2x32xf32>
    %161 = math.exp %160 : vector<2x32xf32>
    %cst_30 = arith.constant 1.000000e+00 : f32
    %162 = vector.broadcast %cst_30 : f32 to vector<2x32xf32>
    %163 = arith.addf %162, %161 : vector<2x32xf32>
    %164 = arith.divf %162, %163 : vector<2x32xf32>
    %165 = vector.extract_strided_slice %158 {offsets = [0, 32], sizes = [2, 32], strides = [1, 1]} : vector<2x128xf32> to vector<2x32xf32>
    %166 = arith.negf %165 : vector<2x32xf32>
    %167 = math.exp %166 : vector<2x32xf32>
    %cst_31 = arith.constant 1.000000e+00 : f32
    %168 = vector.broadcast %cst_31 : f32 to vector<2x32xf32>
    %169 = arith.addf %168, %167 : vector<2x32xf32>
    %170 = arith.divf %168, %169 : vector<2x32xf32>
    %171 = vector.extract_strided_slice %158 {offsets = [0, 64], sizes = [2, 32], strides = [1, 1]} : vector<2x128xf32> to vector<2x32xf32>
    %172 = math.tanh %171 : vector<2x32xf32>
    %173 = vector.extract_strided_slice %158 {offsets = [0, 96], sizes = [2, 32], strides = [1, 1]} : vector<2x128xf32> to vector<2x32xf32>
    %174 = arith.negf %173 : vector<2x32xf32>
    %175 = math.exp %174 : vector<2x32xf32>
    %cst_32 = arith.constant 1.000000e+00 : f32
    %176 = vector.broadcast %cst_32 : f32 to vector<2x32xf32>
    %177 = arith.addf %176, %175 : vector<2x32xf32>
    %178 = arith.divf %176, %177 : vector<2x32xf32>
    %179 = arith.mulf %170, %152 : vector<2x32xf32>
    %180 = arith.mulf %164, %172 : vector<2x32xf32>
    %181 = arith.addf %179, %180 : vector<2x32xf32>
    %182 = math.tanh %181 : vector<2x32xf32>
    %183 = arith.mulf %178, %182 : vector<2x32xf32>
    %184 = vector.extract_strided_slice %7 {offsets = [0, 6, 0], sizes = [2, 1, 128], strides = [1, 1, 1]} : vector<2x8x128xf32> to vector<2x1x128xf32>
    %185 = vector.shape_cast %184 : vector<2x1x128xf32> to vector<2x128xf32>
    %cst_33 = arith.constant dense<0.000000e+00> : vector<2x128xf32>
    %186 = tpu.matmul %183, %2, %cst_33 {dimension_numbers = #tpu.dot_dimension_numbers<[1], [0], [0], [1], [0, 0, 1, 1], [], []>} : vector<2x32xf32>, vector<32x128xf32>, vector<2x128xf32> -> vector<2x128xf32>
    %187 = arith.addf %185, %186 : vector<2x128xf32>
    %188 = vector.extract_strided_slice %187 {offsets = [0, 0], sizes = [2, 32], strides = [1, 1]} : vector<2x128xf32> to vector<2x32xf32>
    %189 = arith.negf %188 : vector<2x32xf32>
    %190 = math.exp %189 : vector<2x32xf32>
    %cst_34 = arith.constant 1.000000e+00 : f32
    %191 = vector.broadcast %cst_34 : f32 to vector<2x32xf32>
    %192 = arith.addf %191, %190 : vector<2x32xf32>
    %193 = arith.divf %191, %192 : vector<2x32xf32>
    %194 = vector.extract_strided_slice %187 {offsets = [0, 32], sizes = [2, 32], strides = [1, 1]} : vector<2x128xf32> to vector<2x32xf32>
    %195 = arith.negf %194 : vector<2x32xf32>
    %196 = math.exp %195 : vector<2x32xf32>
    %cst_35 = arith.constant 1.000000e+00 : f32
    %197 = vector.broadcast %cst_35 : f32 to vector<2x32xf32>
    %198 = arith.addf %197, %196 : vector<2x32xf32>
    %199 = arith.divf %197, %198 : vector<2x32xf32>
    %200 = vector.extract_strided_slice %187 {offsets = [0, 64], sizes = [2, 32], strides = [1, 1]} : vector<2x128xf32> to vector<2x32xf32>
    %201 = math.tanh %200 : vector<2x32xf32>
    %202 = vector.extract_strided_slice %187 {offsets = [0, 96], sizes = [2, 32], strides = [1, 1]} : vector<2x128xf32> to vector<2x32xf32>
    %203 = arith.negf %202 : vector<2x32xf32>
    %204 = math.exp %203 : vector<2x32xf32>
    %cst_36 = arith.constant 1.000000e+00 : f32
    %205 = vector.broadcast %cst_36 : f32 to vector<2x32xf32>
    %206 = arith.addf %205, %204 : vector<2x32xf32>
    %207 = arith.divf %205, %206 : vector<2x32xf32>
    %208 = arith.mulf %199, %181 : vector<2x32xf32>
    %209 = arith.mulf %193, %201 : vector<2x32xf32>
    %210 = arith.addf %208, %209 : vector<2x32xf32>
    %211 = math.tanh %210 : vector<2x32xf32>
    %212 = arith.mulf %207, %211 : vector<2x32xf32>
    %213 = vector.extract_strided_slice %7 {offsets = [0, 7, 0], sizes = [2, 1, 128], strides = [1, 1, 1]} : vector<2x8x128xf32> to vector<2x1x128xf32>
    %214 = vector.shape_cast %213 : vector<2x1x128xf32> to vector<2x128xf32>
    %cst_37 = arith.constant dense<0.000000e+00> : vector<2x128xf32>
    %215 = tpu.matmul %212, %2, %cst_37 {dimension_numbers = #tpu.dot_dimension_numbers<[1], [0], [0], [1], [0, 0, 1, 1], [], []>} : vector<2x32xf32>, vector<32x128xf32>, vector<2x128xf32> -> vector<2x128xf32>
    %216 = arith.addf %214, %215 : vector<2x128xf32>
    %217 = vector.extract_strided_slice %216 {offsets = [0, 0], sizes = [2, 32], strides = [1, 1]} : vector<2x128xf32> to vector<2x32xf32>
    %218 = arith.negf %217 : vector<2x32xf32>
    %219 = math.exp %218 : vector<2x32xf32>
    %cst_38 = arith.constant 1.000000e+00 : f32
    %220 = vector.broadcast %cst_38 : f32 to vector<2x32xf32>
    %221 = arith.addf %220, %219 : vector<2x32xf32>
    %222 = arith.divf %220, %221 : vector<2x32xf32>
    %223 = vector.extract_strided_slice %216 {offsets = [0, 32], sizes = [2, 32], strides = [1, 1]} : vector<2x128xf32> to vector<2x32xf32>
    %224 = arith.negf %223 : vector<2x32xf32>
    %225 = math.exp %224 : vector<2x32xf32>
    %cst_39 = arith.constant 1.000000e+00 : f32
    %226 = vector.broadcast %cst_39 : f32 to vector<2x32xf32>
    %227 = arith.addf %226, %225 : vector<2x32xf32>
    %228 = arith.divf %226, %227 : vector<2x32xf32>
    %229 = vector.extract_strided_slice %216 {offsets = [0, 64], sizes = [2, 32], strides = [1, 1]} : vector<2x128xf32> to vector<2x32xf32>
    %230 = math.tanh %229 : vector<2x32xf32>
    %231 = vector.extract_strided_slice %216 {offsets = [0, 96], sizes = [2, 32], strides = [1, 1]} : vector<2x128xf32> to vector<2x32xf32>
    %232 = arith.negf %231 : vector<2x32xf32>
    %233 = math.exp %232 : vector<2x32xf32>
    %cst_40 = arith.constant 1.000000e+00 : f32
    %234 = vector.broadcast %cst_40 : f32 to vector<2x32xf32>
    %235 = arith.addf %234, %233 : vector<2x32xf32>
    %236 = arith.divf %234, %235 : vector<2x32xf32>
    %237 = arith.mulf %228, %210 : vector<2x32xf32>
    %238 = arith.mulf %222, %230 : vector<2x32xf32>
    %239 = arith.addf %237, %238 : vector<2x32xf32>
    %240 = math.tanh %239 : vector<2x32xf32>
    %241 = arith.mulf %236, %240 : vector<2x32xf32>
    %c0_41 = arith.constant 0 : index
    %c0_42 = arith.constant 0 : index
    %242 = vector.load %arg5[%c0_41, %c0_42] : memref<2x32xf32, #tpu.memory_space<vmem>>, vector<2x32xf32>
    tpu.vector_store %arg5[%c0_41, %c0_42], %241 {strides = array<i32>} : memref<2x32xf32, #tpu.memory_space<vmem>>, vector<2x32xf32>,
    return
  }
  func.func @transform_0(%arg0: i32) -> (i32, i32) {
    %c0_i32 = arith.constant 0 : i32
    %c0_i32_0 = arith.constant 0 : i32
    %c0_i32_1 = arith.constant 0 : i32
    return %c0_i32, %c0_i32_0 : i32, i32
  }
  func.func @transform_1(%arg0: i32) -> (i32, i32) {
    %c0_i32 = arith.constant 0 : i32
    %c0_i32_0 = arith.constant 0 : i32
    %c0_i32_1 = arith.constant 0 : i32
    return %c0_i32, %c0_i32_0 : i32, i32
  }
  func.func @transform_2(%arg0: i32) -> (i32, i32) {
    %c0_i32 = arith.constant 0 : i32
    %c0_i32_0 = arith.constant 0 : i32
    %c0_i32_1 = arith.constant 0 : i32
    return %c0_i32, %c0_i32_0 : i32, i32
  }
  func.func @transform_3(%arg0: i32) -> (i32, i32) {
    %c0_i32 = arith.constant 0 : i32
    %c0_i32_0 = arith.constant 0 : i32
    %c0_i32_1 = arith.constant 0 : i32
    return %c0_i32, %c0_i32_0 : i32, i32
  }
  func.func @transform_4(%arg0: i32) -> (i32, i32) {
    %c0_i32 = arith.constant 0 : i32
    %c0_i32_0 = arith.constant 0 : i32
    %c0_i32_1 = arith.constant 0 : i32
    return %c0_i32, %c0_i32_0 : i32, i32
  }
}

</mosaic_0001>

<llo_original>
// kernel: keras_like_lstm.1
$region0: #{keras_like_lstm.1}
  #allocation0 [shape = 'u32[]', space=smem, size = 0x4, offset = 0x4, fixed_abs, tag = 'smem constant byte address 0x4 - core index']
  #allocation1 [shape = 'u32[144,128]{1,0:T(1,128)}', space=vmem, size = 0x12000, scoped, tag = 'internal scratch']
  %s0 = inlined_call_operand.vmem [shape: f32[16,4], index: 0, kind: input, shape index: {}]
  %s1 = inlined_call_operand.vmem [shape: f32[4,128], index: 1, kind: input, shape index: {}]
  %s2 = inlined_call_operand.hbm [shape: f32[32,128], index: 2, kind: input, shape index: {}]
  %s3 = inlined_call_operand.vmem [shape: f32[1,128], index: 3, kind: input, shape index: {}]
  %s4 = inlined_call_operand.hbm [shape: f32[2,32], index: 4, kind: output, shape index: {}]
  %s5 = sld [smem:[#allocation0]]
  $region30: #{keras_like_lstm.1} parent=0
    _
  %s7 = ssub.s32 1, %s5
  %s8 = scalar_select 0, %s7, %s5
  $region1: #{keras_like_lstm.1} parent=0
    #allocation2 [shape = 'u8[16384]{0}', space=vmem, size = 0x4000, scoped, tag = 'input window, operand 2, single buffered']
    #allocation3 [shape = 's32[1]{0}', space=sflag, size = 0x4, scoped, tag = 'scoped memory for keras_like_lstm.1']
    #allocation4 [shape = 's32[1]{0}', space=sflag, size = 0x4, scoped, tag = 'scoped memory for keras_like_lstm.1']
    #allocation5 [shape = 'u8[1024]{0}', space=vmem, size = 0x400, scoped, tag = 'output window, operand 0, single buffered']
    %9 = vsyncpa [#allocation3], 0
    %10 = vsyncpa [#allocation4], 0
    // Predicated region
    $region2: #{keras_like_lstm.1} parent=1 // pred_check
      _
    $region3: #{keras_like_lstm.1} parent=1 // pred_check_branch
      %12 = sbr.rel (0) target = $region5
    $region4: #{keras_like_lstm.1} parent=1 // pred_region
      _
    $region5: #{keras_like_lstm.1} parent=1 // pred_fallthru
      _
    // Predicated region
    $region6: #{keras_like_lstm.1} parent=1 // pred_check
      _
    $region7: #{keras_like_lstm.1} parent=1 // pred_check_branch
      %14 = sbr.rel (0) target = $region9
    $region8: #{keras_like_lstm.1} parent=1 // pred_region
      _
    $region9: #{keras_like_lstm.1} parent=1 // pred_fallthru
      _
    // Predicated region
    $region10: #{keras_like_lstm.1} parent=1 // pred_check
      _
    $region11: #{keras_like_lstm.1} parent=1 // pred_check_branch
      %16 = sbr.rel (0) target = $region13
    $region12: #{keras_like_lstm.1} parent=1 // pred_region
      %s18 = ssub.s32 512, 512
      %19 = vsyncadd [#allocation3], %s18
      %s20 = sshll.u32 [#allocation2], 4
      %s21 = int_to_ptr.vmem [resolvable:$true] %s20
      %26 = dma.hbm_to_vmem [thread:$0]  %s2, 512, %s21, [#allocation3], 128, 128, 8
    $region13: #{keras_like_lstm.1} parent=1 // pred_fallthru
      _
    // Predicated region
    $region14: #{keras_like_lstm.1} parent=1 // pred_check
      _
    $region15: #{keras_like_lstm.1} parent=1 // pred_check_branch
      %28 = sbr.rel (0) target = $region17
    $region16: #{keras_like_lstm.1} parent=1 // pred_region
      _
    $region17: #{keras_like_lstm.1} parent=1 // pred_fallthru
      _
    // Predicated region
    $region18: #{keras_like_lstm.1} parent=1 // pred_check
      _
    $region19: #{keras_like_lstm.1} parent=1 // pred_check_branch
      %30 = sbr.rel (0) target = $region21
    $region20: #{keras_like_lstm.1} parent=1 // pred_region
      %31 = dma.done [#allocation3], 512
    $region21: #{keras_like_lstm.1} parent=1 // pred_fallthru
      _
    %v32 = vld [vmem:[%s0] sm:$0xff]
    %v33 = vld [vmem:[%s0 + $0x8] sm:$0xff]
    %v34 = vld [vmem:[%s1] sm:$0xf]
    %v35 = vld [vmem:[#allocation2] sm:$0xff]
    %v36 = vld [vmem:[#allocation2 + $0x8] sm:$0xff]
    %v37 = vld [vmem:[#allocation2 + $0x10] sm:$0xff]
    %v38 = vld [vmem:[#allocation2 + $0x18] sm:$0xff]
    %v39 = vld [vmem:[%s3] sm:$0x1]
    %v41 = vlaneseq
    %v42 = vshrl.u32 %v41, 7
    %v43 = vsub.s32 0, %v42
    %v44 = vrot.slane %v39, %v43
    %vm46 = vcmask 31744
    %v48 = vsel %vm46, %v32, 0
    %v51 = vsel %vm46, %v33, 0
    %vm53 = vcmask 1043456
    %v55 = vsel %vm53, %v34, 0
    %57 = vmatprep.subr.mxu0 0.0
    %58 = vmatpush1.msra.mxu0 0.0
    %59 = vmatprep.subr.mxu0 0.0
    %60 = vmatpush1.msra.mxu0 0.0
    %61 = vmatprep.subr.mxu0 0.0
    %62 = vmatpush1.msra.mxu0 0.0
    %63 = vmatprep.subr.mxu0 0.0
    %64 = vmatpush1.msra.mxu0 0.0
    %65 = vmatprep.subr.mxu0 0.0
    %66 = vmatpush1.msra.mxu0 0.0
    %67 = vmatprep.subr.mxu0 0.0
    %68 = vmatpush1.msra.mxu0 0.0
    %69 = vmatprep.subr.mxu0 0.0
    %70 = vmatpush1.msra.mxu0 0.0
    %71 = vmatprep.subr.mxu0 0.0
    %72 = vmatpush1.msra.mxu0 0.0
    %73 = vmatprep.subr.mxu0 0.0
    %74 = vmatpush1.msra.mxu0 0.0
    %75 = vmatprep.subr.mxu0 0.0
    %76 = vmatpush1.msra.mxu0 0.0
    %77 = vmatprep.subr.mxu0 0.0
    %78 = vmatpush1.msra.mxu0 0.0
    %79 = vmatprep.subr.mxu0 0.0
    %80 = vmatpush1.msra.mxu0 0.0
    %81 = vmatprep.subr.mxu0 0.0
    %82 = vmatpush1.msra.mxu0 0.0
    %83 = vmatprep.subr.mxu0 0.0
    %84 = vmatpush1.msra.mxu0 0.0
    %85 = vmatprep.subr.mxu0 0.0
    %86 = vmatpush1.msra.mxu0 0.0
    %87 = vmatprep.subr.mxu0 0.0
    %88 = vmatpush1.msra.mxu0 %v55
    %89 = vmatprep.subr.mxu0 0.0
    %90 = vmatpush2.msra.mxu0 0.0
    %91 = vmatprep.subr.mxu0 0.0
    %92 = vmatpush2.msra.mxu0 0.0
    %93 = vmatprep.subr.mxu0 0.0
    %94 = vmatpush2.msra.mxu0 0.0
    %95 = vmatprep.subr.mxu0 0.0
    %96 = vmatpush2.msra.mxu0 0.0
    %97 = vmatprep.subr.mxu0 0.0
    %98 = vmatpush2.msra.mxu0 0.0
    %99 = vmatprep.subr.mxu0 0.0
    %100 = vmatpush2.msra.mxu0 0.0
    %101 = vmatprep.subr.mxu0 0.0
    %102 = vmatpush2.msra.mxu0 0.0
    %103 = vmatprep.subr.mxu0 0.0
    %104 = vmatpush2.msra.mxu0 0.0
    %105 = vmatprep.subr.mxu0 0.0
    %106 = vmatpush2.msra.mxu0 0.0
    %107 = vmatprep.subr.mxu0 0.0
    %108 = vmatpush2.msra.mxu0 0.0
    %109 = vmatprep.subr.mxu0 0.0
    %110 = vmatpush2.msra.mxu0 0.0
    %111 = vmatprep.subr.mxu0 0.0
    %112 = vmatpush2.msra.mxu0 0.0
    %113 = vmatprep.subr.mxu0 0.0
    %114 = vmatpush2.msra.mxu0 0.0
    %115 = vmatprep.subr.mxu0 0.0
    %116 = vmatpush2.msra.mxu0 0.0
    %117 = vmatprep.subr.mxu0 0.0
    %118 = vmatpush2.msra.mxu0 0.0
    %119 = vmatprep.subr.mxu0 0.0
    %120 = vmatpush2.msra.mxu0 0.0
    %121 = vmatprep.mubr.f32.mxu0 0.0
    %122 = vmatmul.mubr.f32.gmra.mxu0 %v48
    %v123 = vpop.f32.mrf.mxu0
    %v124 = vadd.f32 %v44, %v123
    %v125 = vpop.f32.mrf.mxu0
    %126 = vmatprep.mubr.f32.mxu0 0.0
    %127 = vmatmul.mubr.f32.gmra.mxu0 %v51
    %v128 = vpop.f32.mrf.mxu0
    %v129 = vadd.f32 %v44, %v128
    %v130 = vpop.f32.mrf.mxu0
    %131 = vdwg.mxu0
    %vm132 = vcmask 261120
    %v134 = vsel %vm132, 0.0, 0
    %136 = vmatprep.subr.mxu0 0.0
    %137 = vmatpush1.msra.mxu0 0.0
    %138 = vmatprep.subr.mxu0 0.0
    %139 = vmatpush1.msra.mxu0 0.0
    %140 = vmatprep.subr.mxu0 0.0
    %141 = vmatpush1.msra.mxu0 0.0
    %142 = vmatprep.subr.mxu0 0.0
    %143 = vmatpush1.msra.mxu0 0.0
    %144 = vmatprep.subr.mxu0 0.0
    %145 = vmatpush1.msra.mxu0 0.0
    %146 = vmatprep.subr.mxu0 0.0
    %147 = vmatpush1.msra.mxu0 0.0
    %148 = vmatprep.subr.mxu0 0.0
    %149 = vmatpush1.msra.mxu0 0.0
    %150 = vmatprep.subr.mxu0 0.0
    %151 = vmatpush1.msra.mxu0 0.0
    %152 = vmatprep.subr.mxu0 0.0
    %153 = vmatpush1.msra.mxu0 0.0
    %154 = vmatprep.subr.mxu0 0.0
    %155 = vmatpush1.msra.mxu0 0.0
    %156 = vmatprep.subr.mxu0 0.0
    %157 = vmatpush1.msra.mxu0 0.0
    %158 = vmatprep.subr.mxu0 0.0
    %159 = vmatpush1.msra.mxu0 0.0
    %160 = vmatprep.subr.mxu0 0.0
    %161 = vmatpush1.msra.mxu0 %v38
    %162 = vmatprep.subr.mxu0 0.0
    %163 = vmatpush1.msra.mxu0 %v37
    %164 = vmatprep.subr.mxu0 0.0
    %165 = vmatpush1.msra.mxu0 %v36
    %166 = vmatprep.subr.mxu0 0.0
    %167 = vmatpush1.msra.mxu0 %v35
    %168 = vmatprep.subr.mxu0 0.0
    %169 = vmatpush2.msra.mxu0 0.0
    %170 = vmatprep.subr.mxu0 0.0
    %171 = vmatpush2.msra.mxu0 0.0
    %172 = vmatprep.subr.mxu0 0.0
    %173 = vmatpush2.msra.mxu0 0.0
    %174 = vmatprep.subr.mxu0 0.0
    %175 = vmatpush2.msra.mxu0 0.0
    %176 = vmatprep.subr.mxu0 0.0
    %177 = vmatpush2.msra.mxu0 0.0
    %178 = vmatprep.subr.mxu0 0.0
    %179 = vmatpush2.msra.mxu0 0.0
    %180 = vmatprep.subr.mxu0 0.0
    %181 = vmatpush2.msra.mxu0 0.0
    %182 = vmatprep.subr.mxu0 0.0
    %183 = vmatpush2.msra.mxu0 0.0
    %184 = vmatprep.subr.mxu0 0.0
    %185 = vmatpush2.msra.mxu0 0.0
    %186 = vmatprep.subr.mxu0 0.0
    %187 = vmatpush2.msra.mxu0 0.0
    %188 = vmatprep.subr.mxu0 0.0
    %189 = vmatpush2.msra.mxu0 0.0
    %190 = vmatprep.subr.mxu0 0.0
    %191 = vmatpush2.msra.mxu0 0.0
    %192 = vmatprep.subr.mxu0 0.0
    %193 = vmatpush2.msra.mxu0 0.0
    %194 = vmatprep.subr.mxu0 0.0
    %195 = vmatpush2.msra.mxu0 0.0
    %196 = vmatprep.subr.mxu0 0.0
    %197 = vmatpush2.msra.mxu0 0.0
    %198 = vmatprep.subr.mxu0 0.0
    %199 = vmatpush2.msra.mxu0 0.0
    %200 = vmatprep.mubr.f32.mxu0 0.0
    %201 = vmatmul.mubr.f32.gmra.mxu0 %v134
    %v202 = vpop.f32.mrf.mxu0
    %v203 = vadd.f32 0.0, %v202
    %v204 = vpop.f32.mrf.mxu0
    %205 = vdwg.mxu0
    %v207 = vrot.slane %v203, 1
    %v210 = vadd.f32 %v124, %v203
    %v211 = vadd.f32 %v129, %v207
    %v212 = vxor.u32 %v210, 2147483648
    %v213 = vxor.u32 %v211, 2147483648
    %v214 = vmul.f32 %v212, 1.442695
    %v215 = vpow.pop %v214
    %v216 = vmul.f32 %v213, 1.442695
    %v217 = vpow.pop %v216
    %v218 = vadd.f32 %v215, 1.0
    %v219 = vadd.f32 %v217, 1.0
    %v220 = vrcp.pop %v218
    %v221 = vmul.f32 1.0, %v220
    %v222 = vrcp.pop %v219
    %v223 = vmul.f32 1.0, %v222
    %v224 = vtanh.pop %v210
    %v225 = vtanh.pop %v211
    %v226 = vmul.f32 %v221, 0.0
    %v227 = vmul.f32 %v223, 0.0
    %230 = vrot.lane.b32.xlu0 %v224, 64
    %v231 = vpop.permute.xlu0 %230
    %232 = vrot.lane.b32.xlu0 %v225, 64
    %v233 = vpop.permute.xlu0 %232
    %v236 = vmul.f32 %v221, %v231
    %v237 = vmul.f32 %v223, %v233
    %240 = vrot.lane.b32.xlu0 %v236, 32
    %v241 = vpop.permute.xlu0 %240
    %242 = vrot.lane.b32.xlu0 %v237, 32
    %v243 = vpop.permute.xlu0 %242
    %v246 = vadd.f32 %v226, %v241
    %v247 = vadd.f32 %v227, %v243
    %v248 = vtanh.pop %v246
    %v249 = vtanh.pop %v247
    %252 = vrot.lane.b32.xlu0 %v248, 64
    %v253 = vpop.permute.xlu0 %252
    %254 = vrot.lane.b32.xlu0 %v249, 64
    %v255 = vpop.permute.xlu0 %254
    %v258 = vmul.f32 %v221, %v253
    %v259 = vmul.f32 %v223, %v255
    %v262 = vrot.slane %v259, 7
    %vm263 = vcmask 1041409
    %v264 = vsel %vm263, %v262, %v258
    %265 = vrot.lane.b32.xlu0 %v264, 32
    %v266 = vpop.permute.xlu0 %265
    %v267 = vsel %vm132, %v266, 0
    %269 = vmatprep.subr.mxu0 0.0
    %270 = vmatpush1.msra.mxu0 0.0
    %271 = vmatprep.subr.mxu0 0.0
    %272 = vmatpush1.msra.mxu0 0.0
    %273 = vmatprep.subr.mxu0 0.0
    %274 = vmatpush1.msra.mxu0 0.0
    %275 = vmatprep.subr.mxu0 0.0
    %276 = vmatpush1.msra.mxu0 0.0
    %277 = vmatprep.subr.mxu0 0.0
    %278 = vmatpush1.msra.mxu0 0.0
    %279 = vmatprep.subr.mxu0 0.0
    %280 = vmatpush1.msra.mxu0 0.0
    %281 = vmatprep.subr.mxu0 0.0
    %282 = vmatpush1.msra.mxu0 0.0
    %283 = vmatprep.subr.mxu0 0.0
    %284 = vmatpush1.msra.mxu0 0.0
    %285 = vmatprep.subr.mxu0 0.0
    %286 = vmatpush1.msra.mxu0 0.0
    %287 = vmatprep.subr.mxu0 0.0
    %288 = vmatpush1.msra.mxu0 0.0
    %289 = vmatprep.subr.mxu0 0.0
    %290 = vmatpush1.msra.mxu0 0.0
    %291 = vmatprep.subr.mxu0 0.0
    %292 = vmatpush1.msra.mxu0 0.0
    %293 = vmatprep.subr.mxu0 0.0
    %294 = vmatpush1.msra.mxu0 %v38
    %295 = vmatprep.subr.mxu0 0.0
    %296 = vmatpush1.msra.mxu0 %v37
    %297 = vmatprep.subr.mxu0 0.0
    %298 = vmatpush1.msra.mxu0 %v36
    %299 = vmatprep.subr.mxu0 0.0
    %300 = vmatpush1.msra.mxu0 %v35
    %301 = vmatprep.subr.mxu0 0.0
    %302 = vmatpush2.msra.mxu0 0.0
    %303 = vmatprep.subr.mxu0 0.0
    %304 = vmatpush2.msra.mxu0 0.0
    %305 = vmatprep.subr.mxu0 0.0
    %306 = vmatpush2.msra.mxu0 0.0
    %307 = vmatprep.subr.mxu0 0.0
    %308 = vmatpush2.msra.mxu0 0.0
    %309 = vmatprep.subr.mxu0 0.0
    %310 = vmatpush2.msra.mxu0 0.0
    %311 = vmatprep.subr.mxu0 0.0
    %312 = vmatpush2.msra.mxu0 0.0
    %313 = vmatprep.subr.mxu0 0.0
    %314 = vmatpush2.msra.mxu0 0.0
    %315 = vmatprep.subr.mxu0 0.0
    %316 = vmatpush2.msra.mxu0 0.0
    %317 = vmatprep.subr.mxu0 0.0
    %318 = vmatpush2.msra.mxu0 0.0
    %319 = vmatprep.subr.mxu0 0.0
    %320 = vmatpush2.msra.mxu0 0.0
    %321 = vmatprep.subr.mxu0 0.0
    %322 = vmatpush2.msra.mxu0 0.0
    %323 = vmatprep.subr.mxu0 0.0
    %324 = vmatpush2.msra.mxu0 0.0
    %325 = vmatprep.subr.mxu0 0.0
    %326 = vmatpush2.msra.mxu0 0.0
    %327 = vmatprep.subr.mxu0 0.0
    %328 = vmatpush2.msra.mxu0 0.0
    %329 = vmatprep.subr.mxu0 0.0
    %330 = vmatpush2.msra.mxu0 0.0
    %331 = vmatprep.subr.mxu0 0.0
    %332 = vmatpush2.msra.mxu0 0.0
    %333 = vmatprep.mubr.f32.mxu0 0.0
    %334 = vmatmul.mubr.f32.gmra.mxu0 %v267
    %v335 = vpop.f32.mrf.mxu0
    %v336 = vadd.f32 0.0, %v335
    %v337 = vpop.f32.mrf.mxu0
    %338 = vdwg.mxu0
    %v340 = vrot.slane %v336, 7
    %v343 = vadd.f32 %v124, %v340
    %v344 = vadd.f32 %v129, %v336
    %v345 = vxor.u32 %v343, 2147483648
    %v346 = vxor.u32 %v344, 2147483648
    %v347 = vmul.f32 %v345, 1.442695
    %v348 = vpow.pop %v347
    %v349 = vmul.f32 %v346, 1.442695
    %v350 = vpow.pop %v349
    %v351 = vadd.f32 %v348, 1.0
    %v352 = vadd.f32 %v350, 1.0
    %v353 = vrcp.pop %v351
    %v354 = vmul.f32 1.0, %v353
    %v355 = vrcp.pop %v352
    %v356 = vmul.f32 1.0, %v355
    %v357 = vtanh.pop %v343
    %v358 = vtanh.pop %v344
    %v361 = vrot.slane %v246, 7
    %v362 = vrot.slane %v247, 7
    %v365 = vmul.f32 %v354, %v361
    %v366 = vmul.f32 %v356, %v362
    %369 = vrot.lane.b32.xlu0 %v357, 64
    %v370 = vpop.permute.xlu0 %369
    %371 = vrot.lane.b32.xlu0 %v358, 64
    %v372 = vpop.permute.xlu0 %371
    %v375 = vmul.f32 %v354, %v370
    %v376 = vmul.f32 %v356, %v372
    %379 = vrot.lane.b32.xlu0 %v375, 32
    %v380 = vpop.permute.xlu0 %379
    %381 = vrot.lane.b32.xlu0 %v376, 32
    %v382 = vpop.permute.xlu0 %381
    %v385 = vadd.f32 %v365, %v380
    %v386 = vadd.f32 %v366, %v382
    %v387 = vtanh.pop %v385
    %v388 = vtanh.pop %v386
    %391 = vrot.lane.b32.xlu0 %v387, 64
    %v392 = vpop.permute.xlu0 %391
    %393 = vrot.lane.b32.xlu0 %v388, 64
    %v394 = vpop.permute.xlu0 %393
    %v397 = vmul.f32 %v354, %v392
    %v398 = vmul.f32 %v356, %v394
    %v401 = vrot.slane %v397, 1
    %v402 = vsel %vm263, %v398, %v401
    %403 = vrot.lane.b32.xlu0 %v402, 32
    %v404 = vpop.permute.xlu0 %403
    %v405 = vsel %vm132, %v404, 0
    %407 = vmatprep.subr.mxu0 0.0
    %408 = vmatpush1.msra.mxu0 0.0
    %409 = vmatprep.subr.mxu0 0.0
    %410 = vmatpush1.msra.mxu0 0.0
    %411 = vmatprep.subr.mxu0 0.0
    %412 = vmatpush1.msra.mxu0 0.0
    %413 = vmatprep.subr.mxu0 0.0
    %414 = vmatpush1.msra.mxu0 0.0
    %415 = vmatprep.subr.mxu0 0.0
    %416 = vmatpush1.msra.mxu0 0.0
    %417 = vmatprep.subr.mxu0 0.0
    %418 = vmatpush1.msra.mxu0 0.0
    %419 = vmatprep.subr.mxu0 0.0
    %420 = vmatpush1.msra.mxu0 0.0
    %421 = vmatprep.subr.mxu0 0.0
    %422 = vmatpush1.msra.mxu0 0.0
    %423 = vmatprep.subr.mxu0 0.0
    %424 = vmatpush1.msra.mxu0 0.0
    %425 = vmatprep.subr.mxu0 0.0
    %426 = vmatpush1.msra.mxu0 0.0
    %427 = vmatprep.subr.mxu0 0.0
    %428 = vmatpush1.msra.mxu0 0.0
    %429 = vmatprep.subr.mxu0 0.0
    %430 = vmatpush1.msra.mxu0 0.0
    %431 = vmatprep.subr.mxu0 0.0
    %432 = vmatpush1.msra.mxu0 %v38
    %433 = vmatprep.subr.mxu0 0.0
    %434 = vmatpush1.msra.mxu0 %v37
    %435 = vmatprep.subr.mxu0 0.0
    %436 = vmatpush1.msra.mxu0 %v36
    %437 = vmatprep.subr.mxu0 0.0
    %438 = vmatpush1.msra.mxu0 %v35
    %439 = vmatprep.subr.mxu0 0.0
    %440 = vmatpush2.msra.mxu0 0.0
    %441 = vmatprep.subr.mxu0 0.0
    %442 = vmatpush2.msra.mxu0 0.0
    %443 = vmatprep.subr.mxu0 0.0
    %444 = vmatpush2.msra.mxu0 0.0
    %445 = vmatprep.subr.mxu0 0.0
    %446 = vmatpush2.msra.mxu0 0.0
    %447 = vmatprep.subr.mxu0 0.0
    %448 = vmatpush2.msra.mxu0 0.0
    %449 = vmatprep.subr.mxu0 0.0
    %450 = vmatpush2.msra.mxu0 0.0
    %451 = vmatprep.subr.mxu0 0.0
    %452 = vmatpush2.msra.mxu0 0.0
    %453 = vmatprep.subr.mxu0 0.0
    %454 = vmatpush2.msra.mxu0 0.0
    %455 = vmatprep.subr.mxu0 0.0
    %456 = vmatpush2.msra.mxu0 0.0
    %457 = vmatprep.subr.mxu0 0.0
    %458 = vmatpush2.msra.mxu0 0.0
    %459 = vmatprep.subr.mxu0 0.0
    %460 = vmatpush2.msra.mxu0 0.0
    %461 = vmatprep.subr.mxu0 0.0
    %462 = vmatpush2.msra.mxu0 0.0
    %463 = vmatprep.subr.mxu0 0.0
    %464 = vmatpush2.msra.mxu0 0.0
    %465 = vmatprep.subr.mxu0 0.0
    %466 = vmatpush2.msra.mxu0 0.0
    %467 = vmatprep.subr.mxu0 0.0
    %468 = vmatpush2.msra.mxu0 0.0
    %469 = vmatprep.subr.mxu0 0.0
    %470 = vmatpush2.msra.mxu0 0.0
    %471 = vmatprep.mubr.f32.mxu0 0.0
    %472 = vmatmul.mubr.f32.gmra.mxu0 %v405
    %v473 = vpop.f32.mrf.mxu0
    %v474 = vadd.f32 0.0, %v473
    %v475 = vpop.f32.mrf.mxu0
    %476 = vdwg.mxu0
    %v478 = vrot.slane %v474, 6
    %v479 = vrot.slane %v474, 7
    %v482 = vadd.f32 %v124, %v478
    %v483 = vadd.f32 %v129, %v479
    %v484 = vxor.u32 %v482, 2147483648
    %v485 = vxor.u32 %v483, 2147483648
    %v486 = vmul.f32 %v484, 1.442695
    %v487 = vpow.pop %v486
    %v488 = vmul.f32 %v485, 1.442695
    %v489 = vpow.pop %v488
    %v490 = vadd.f32 %v487, 1.0
    %v491 = vadd.f32 %v489, 1.0
    %v492 = vrcp.pop %v490
    %v493 = vmul.f32 1.0, %v492
    %v494 = vrcp.pop %v491
    %v495 = vmul.f32 1.0, %v494
    %v496 = vtanh.pop %v482
    %v497 = vtanh.pop %v483
    %v500 = vrot.slane %v385, 7
    %v501 = vrot.slane %v386, 7
    %v504 = vmul.f32 %v493, %v500
    %v505 = vmul.f32 %v495, %v501
    %508 = vrot.lane.b32.xlu0 %v496, 64
    %v509 = vpop.permute.xlu0 %508
    %510 = vrot.lane.b32.xlu0 %v497, 64
    %v511 = vpop.permute.xlu0 %510
    %v514 = vmul.f32 %v493, %v509
    %v515 = vmul.f32 %v495, %v511
    %518 = vrot.lane.b32.xlu0 %v514, 32
    %v519 = vpop.permute.xlu0 %518
    %520 = vrot.lane.b32.xlu0 %v515, 32
    %v521 = vpop.permute.xlu0 %520
    %v524 = vadd.f32 %v504, %v519
    %v525 = vadd.f32 %v505, %v521
    %v526 = vtanh.pop %v524
    %v527 = vtanh.pop %v525
    %530 = vrot.lane.b32.xlu0 %v526, 64
    %v531 = vpop.permute.xlu0 %530
    %532 = vrot.lane.b32.xlu0 %v527, 64
    %v533 = vpop.permute.xlu0 %532
    %v536 = vmul.f32 %v493, %v531
    %v537 = vmul.f32 %v495, %v533
    %v540 = vrot.slane %v536, 2
    %v541 = vrot.slane %v537, 1
    %v542 = vsel %vm263, %v541, %v540
    %543 = vrot.lane.b32.xlu0 %v542, 32
    %v544 = vpop.permute.xlu0 %543
    %v545 = vsel %vm132, %v544, 0
    %547 = vmatprep.subr.mxu0 0.0
    %548 = vmatpush1.msra.mxu0 0.0
    %549 = vmatprep.subr.mxu0 0.0
    %550 = vmatpush1.msra.mxu0 0.0
    %551 = vmatprep.subr.mxu0 0.0
    %552 = vmatpush1.msra.mxu0 0.0
    %553 = vmatprep.subr.mxu0 0.0
    %554 = vmatpush1.msra.mxu0 0.0
    %555 = vmatprep.subr.mxu0 0.0
    %556 = vmatpush1.msra.mxu0 0.0
    %557 = vmatprep.subr.mxu0 0.0
    %558 = vmatpush1.msra.mxu0 0.0
    %559 = vmatprep.subr.mxu0 0.0
    %560 = vmatpush1.msra.mxu0 0.0
    %561 = vmatprep.subr.mxu0 0.0
    %562 = vmatpush1.msra.mxu0 0.0
    %563 = vmatprep.subr.mxu0 0.0
    %564 = vmatpush1.msra.mxu0 0.0
    %565 = vmatprep.subr.mxu0 0.0
    %566 = vmatpush1.msra.mxu0 0.0
    %567 = vmatprep.subr.mxu0 0.0
    %568 = vmatpush1.msra.mxu0 0.0
    %569 = vmatprep.subr.mxu0 0.0
    %570 = vmatpush1.msra.mxu0 0.0
    %571 = vmatprep.subr.mxu0 0.0
    %572 = vmatpush1.msra.mxu0 %v38
    %573 = vmatprep.subr.mxu0 0.0
    %574 = vmatpush1.msra.mxu0 %v37
    %575 = vmatprep.subr.mxu0 0.0
    %576 = vmatpush1.msra.mxu0 %v36
    %577 = vmatprep.subr.mxu0 0.0
    %578 = vmatpush1.msra.mxu0 %v35
    %579 = vmatprep.subr.mxu0 0.0
    %580 = vmatpush2.msra.mxu0 0.0
    %581 = vmatprep.subr.mxu0 0.0
    %582 = vmatpush2.msra.mxu0 0.0
    %583 = vmatprep.subr.mxu0 0.0
    %584 = vmatpush2.msra.mxu0 0.0
    %585 = vmatprep.subr.mxu0 0.0
    %586 = vmatpush2.msra.mxu0 0.0
    %587 = vmatprep.subr.mxu0 0.0
    %588 = vmatpush2.msra.mxu0 0.0
    %589 = vmatprep.subr.mxu0 0.0
    %590 = vmatpush2.msra.mxu0 0.0
    %591 = vmatprep.subr.mxu0 0.0
    %592 = vmatpush2.msra.mxu0 0.0
    %593 = vmatprep.subr.mxu0 0.0
    %594 = vmatpush2.msra.mxu0 0.0
    %595 = vmatprep.subr.mxu0 0.0
    %596 = vmatpush2.msra.mxu0 0.0
    %597 = vmatprep.subr.mxu0 0.0
    %598 = vmatpush2.msra.mxu0 0.0
    %599 = vmatprep.subr.mxu0 0.0
    %600 = vmatpush2.msra.mxu0 0.0
    %601 = vmatprep.subr.mxu0 0.0
    %602 = vmatpush2.msra.mxu0 0.0
    %603 = vmatprep.subr.mxu0 0.0
    %604 = vmatpush2.msra.mxu0 0.0
    %605 = vmatprep.subr.mxu0 0.0
    %606 = vmatpush2.msra.mxu0 0.0
    %607 = vmatprep.subr.mxu0 0.0
    %608 = vmatpush2.msra.mxu0 0.0
    %609 = vmatprep.subr.mxu0 0.0
    %610 = vmatpush2.msra.mxu0 0.0
    %611 = vmatprep.mubr.f32.mxu0 0.0
    %612 = vmatmul.mubr.f32.gmra.mxu0 %v545
    %v613 = vpop.f32.mrf.mxu0
    %v614 = vadd.f32 0.0, %v613
    %v615 = vpop.f32.mrf.mxu0
    %616 = vdwg.mxu0
    %v618 = vrot.slane %v614, 5
    %v619 = vrot.slane %v614, 6
    %v622 = vadd.f32 %v124, %v618
    %v623 = vadd.f32 %v129, %v619
    %v624 = vxor.u32 %v622, 2147483648
    %v625 = vxor.u32 %v623, 2147483648
    %v626 = vmul.f32 %v624, 1.442695
    %v627 = vpow.pop %v626
    %v628 = vmul.f32 %v625, 1.442695
    %v629 = vpow.pop %v628
    %v630 = vadd.f32 %v627, 1.0
    %v631 = vadd.f32 %v629, 1.0
    %v632 = vrcp.pop %v630
    %v633 = vmul.f32 1.0, %v632
    %v634 = vrcp.pop %v631
    %v635 = vmul.f32 1.0, %v634
    %v636 = vtanh.pop %v622
    %v637 = vtanh.pop %v623
    %v640 = vrot.slane %v524, 7
    %v641 = vrot.slane %v525, 7
    %v644 = vmul.f32 %v633, %v640
    %v645 = vmul.f32 %v635, %v641
    %648 = vrot.lane.b32.xlu0 %v636, 64
    %v649 = vpop.permute.xlu0 %648
    %650 = vrot.lane.b32.xlu0 %v637, 64
    %v651 = vpop.permute.xlu0 %650
    %v654 = vmul.f32 %v633, %v649
    %v655 = vmul.f32 %v635, %v651
    %658 = vrot.lane.b32.xlu0 %v654, 32
    %v659 = vpop.permute.xlu0 %658
    %660 = vrot.lane.b32.xlu0 %v655, 32
    %v661 = vpop.permute.xlu0 %660
    %v664 = vadd.f32 %v644, %v659
    %v665 = vadd.f32 %v645, %v661
    %v666 = vtanh.pop %v664
    %v667 = vtanh.pop %v665
    %670 = vrot.lane.b32.xlu0 %v666, 64
    %v671 = vpop.permute.xlu0 %670
    %672 = vrot.lane.b32.xlu0 %v667, 64
    %v673 = vpop.permute.xlu0 %672
    %v676 = vmul.f32 %v633, %v671
    %v677 = vmul.f32 %v635, %v673
    %v680 = vrot.slane %v676, 3
    %v681 = vrot.slane %v677, 2
    %v682 = vsel %vm263, %v681, %v680
    %683 = vrot.lane.b32.xlu0 %v682, 32
    %v684 = vpop.permute.xlu0 %683
    %v685 = vsel %vm132, %v684, 0
    %687 = vmatprep.subr.mxu0 0.0
    %688 = vmatpush1.msra.mxu0 0.0
    %689 = vmatprep.subr.mxu0 0.0
    %690 = vmatpush1.msra.mxu0 0.0
    %691 = vmatprep.subr.mxu0 0.0
    %692 = vmatpush1.msra.mxu0 0.0
    %693 = vmatprep.subr.mxu0 0.0
    %694 = vmatpush1.msra.mxu0 0.0
    %695 = vmatprep.subr.mxu0 0.0
    %696 = vmatpush1.msra.mxu0 0.0
    %697 = vmatprep.subr.mxu0 0.0
    %698 = vmatpush1.msra.mxu0 0.0
    %699 = vmatprep.subr.mxu0 0.0
    %700 = vmatpush1.msra.mxu0 0.0
    %701 = vmatprep.subr.mxu0 0.0
    %702 = vmatpush1.msra.mxu0 0.0
    %703 = vmatprep.subr.mxu0 0.0
    %704 = vmatpush1.msra.mxu0 0.0
    %705 = vmatprep.subr.mxu0 0.0
    %706 = vmatpush1.msra.mxu0 0.0
    %707 = vmatprep.subr.mxu0 0.0
    %708 = vmatpush1.msra.mxu0 0.0
    %709 = vmatprep.subr.mxu0 0.0
    %710 = vmatpush1.msra.mxu0 0.0
    %711 = vmatprep.subr.mxu0 0.0
    %712 = vmatpush1.msra.mxu0 %v38
    %713 = vmatprep.subr.mxu0 0.0
    %714 = vmatpush1.msra.mxu0 %v37
    %715 = vmatprep.subr.mxu0 0.0
    %716 = vmatpush1.msra.mxu0 %v36
    %717 = vmatprep.subr.mxu0 0.0
    %718 = vmatpush1.msra.mxu0 %v35
    %719 = vmatprep.subr.mxu0 0.0
    %720 = vmatpush2.msra.mxu0 0.0
    %721 = vmatprep.subr.mxu0 0.0
    %722 = vmatpush2.msra.mxu0 0.0
    %723 = vmatprep.subr.mxu0 0.0
    %724 = vmatpush2.msra.mxu0 0.0
    %725 = vmatprep.subr.mxu0 0.0
    %726 = vmatpush2.msra.mxu0 0.0
    %727 = vmatprep.subr.mxu0 0.0
    %728 = vmatpush2.msra.mxu0 0.0
    %729 = vmatprep.subr.mxu0 0.0
    %730 = vmatpush2.msra.mxu0 0.0
    %731 = vmatprep.subr.mxu0 0.0
    %732 = vmatpush2.msra.mxu0 0.0
    %733 = vmatprep.subr.mxu0 0.0
    %734 = vmatpush2.msra.mxu0 0.0
    %735 = vmatprep.subr.mxu0 0.0
    %736 = vmatpush2.msra.mxu0 0.0
    %737 = vmatprep.subr.mxu0 0.0
    %738 = vmatpush2.msra.mxu0 0.0
    %739 = vmatprep.subr.mxu0 0.0
    %740 = vmatpush2.msra.mxu0 0.0
    %741 = vmatprep.subr.mxu0 0.0
    %742 = vmatpush2.msra.mxu0 0.0
    %743 = vmatprep.subr.mxu0 0.0
    %744 = vmatpush2.msra.mxu0 0.0
    %745 = vmatprep.subr.mxu0 0.0
    %746 = vmatpush2.msra.mxu0 0.0
    %747 = vmatprep.subr.mxu0 0.0
    %748 = vmatpush2.msra.mxu0 0.0
    %749 = vmatprep.subr.mxu0 0.0
    %750 = vmatpush2.msra.mxu0 0.0
    %751 = vmatprep.mubr.f32.mxu0 0.0
    %752 = vmatmul.mubr.f32.gmra.mxu0 %v685
    %v753 = vpop.f32.mrf.mxu0
    %v754 = vadd.f32 0.0, %v753
    %v755 = vpop.f32.mrf.mxu0
    %756 = vdwg.mxu0
    %v758 = vrot.slane %v754, 4
    %v759 = vrot.slane %v754, 5
    %v762 = vadd.f32 %v124, %v758
    %v763 = vadd.f32 %v129, %v759
    %v764 = vxor.u32 %v762, 2147483648
    %v765 = vxor.u32 %v763, 2147483648
    %v766 = vmul.f32 %v764, 1.442695
    %v767 = vpow.pop %v766
    %v768 = vmul.f32 %v765, 1.442695
    %v769 = vpow.pop %v768
    %v770 = vadd.f32 %v767, 1.0
    %v771 = vadd.f32 %v769, 1.0
    %v772 = vrcp.pop %v770
    %v773 = vmul.f32 1.0, %v772
    %v774 = vrcp.pop %v771
    %v775 = vmul.f32 1.0, %v774
    %v776 = vtanh.pop %v762
    %v777 = vtanh.pop %v763
    %v780 = vrot.slane %v664, 7
    %v781 = vrot.slane %v665, 7
    %v784 = vmul.f32 %v773, %v780
    %v785 = vmul.f32 %v775, %v781
    %788 = vrot.lane.b32.xlu0 %v776, 64
    %v789 = vpop.permute.xlu0 %788
    %790 = vrot.lane.b32.xlu0 %v777, 64
    %v791 = vpop.permute.xlu0 %790
    %v794 = vmul.f32 %v773, %v789
    %v795 = vmul.f32 %v775, %v791
    %798 = vrot.lane.b32.xlu0 %v794, 32
    %v799 = vpop.permute.xlu0 %798
    %800 = vrot.lane.b32.xlu0 %v795, 32
    %v801 = vpop.permute.xlu0 %800
    %v804 = vadd.f32 %v784, %v799
    %v805 = vadd.f32 %v785, %v801
    %v806 = vtanh.pop %v804
    %v807 = vtanh.pop %v805
    %810 = vrot.lane.b32.xlu0 %v806, 64
    %v811 = vpop.permute.xlu0 %810
    %812 = vrot.lane.b32.xlu0 %v807, 64
    %v813 = vpop.permute.xlu0 %812
    %v816 = vmul.f32 %v773, %v811
    %v817 = vmul.f32 %v775, %v813
    %v820 = vrot.slane %v816, 4
    %v821 = vrot.slane %v817, 3
    %v822 = vsel %vm263, %v821, %v820
    %823 = vrot.lane.b32.xlu0 %v822, 32
    %v824 = vpop.permute.xlu0 %823
    %v825 = vsel %vm132, %v824, 0
    %827 = vmatprep.subr.mxu0 0.0
    %828 = vmatpush1.msra.mxu0 0.0
    %829 = vmatprep.subr.mxu0 0.0
    %830 = vmatpush1.msra.mxu0 0.0
    %831 = vmatprep.subr.mxu0 0.0
    %832 = vmatpush1.msra.mxu0 0.0
    %833 = vmatprep.subr.mxu0 0.0
    %834 = vmatpush1.msra.mxu0 0.0
    %835 = vmatprep.subr.mxu0 0.0
    %836 = vmatpush1.msra.mxu0 0.0
    %837 = vmatprep.subr.mxu0 0.0
    %838 = vmatpush1.msra.mxu0 0.0
    %839 = vmatprep.subr.mxu0 0.0
    %840 = vmatpush1.msra.mxu0 0.0
    %841 = vmatprep.subr.mxu0 0.0
    %842 = vmatpush1.msra.mxu0 0.0
    %843 = vmatprep.subr.mxu0 0.0
    %844 = vmatpush1.msra.mxu0 0.0
    %845 = vmatprep.subr.mxu0 0.0
    %846 = vmatpush1.msra.mxu0 0.0
    %847 = vmatprep.subr.mxu0 0.0
    %848 = vmatpush1.msra.mxu0 0.0
    %849 = vmatprep.subr.mxu0 0.0
    %850 = vmatpush1.msra.mxu0 0.0
    %851 = vmatprep.subr.mxu0 0.0
    %852 = vmatpush1.msra.mxu0 %v38
    %853 = vmatprep.subr.mxu0 0.0
    %854 = vmatpush1.msra.mxu0 %v37
    %855 = vmatprep.subr.mxu0 0.0
    %856 = vmatpush1.msra.mxu0 %v36
    %857 = vmatprep.subr.mxu0 0.0
    %858 = vmatpush1.msra.mxu0 %v35
    %859 = vmatprep.subr.mxu0 0.0
    %860 = vmatpush2.msra.mxu0 0.0
    %861 = vmatprep.subr.mxu0 0.0
    %862 = vmatpush2.msra.mxu0 0.0
    %863 = vmatprep.subr.mxu0 0.0
    %864 = vmatpush2.msra.mxu0 0.0
    %865 = vmatprep.subr.mxu0 0.0
    %866 = vmatpush2.msra.mxu0 0.0
    %867 = vmatprep.subr.mxu0 0.0
    %868 = vmatpush2.msra.mxu0 0.0
    %869 = vmatprep.subr.mxu0 0.0
    %870 = vmatpush2.msra.mxu0 0.0
    %871 = vmatprep.subr.mxu0 0.0
    %872 = vmatpush2.msra.mxu0 0.0
    %873 = vmatprep.subr.mxu0 0.0
    %874 = vmatpush2.msra.mxu0 0.0
    %875 = vmatprep.subr.mxu0 0.0
    %876 = vmatpush2.msra.mxu0 0.0
    %877 = vmatprep.subr.mxu0 0.0
    %878 = vmatpush2.msra.mxu0 0.0
    %879 = vmatprep.subr.mxu0 0.0
    %880 = vmatpush2.msra.mxu0 0.0
    %881 = vmatprep.subr.mxu0 0.0
    %882 = vmatpush2.msra.mxu0 0.0
    %883 = vmatprep.subr.mxu0 0.0
    %884 = vmatpush2.msra.mxu0 0.0
    %885 = vmatprep.subr.mxu0 0.0
    %886 = vmatpush2.msra.mxu0 0.0
    %887 = vmatprep.subr.mxu0 0.0
    %888 = vmatpush2.msra.mxu0 0.0
    %889 = vmatprep.subr.mxu0 0.0
    %890 = vmatpush2.msra.mxu0 0.0
    %891 = vmatprep.mubr.f32.mxu0 0.0
    %892 = vmatmul.mubr.f32.gmra.mxu0 %v825
    %v893 = vpop.f32.mrf.mxu0
    %v894 = vadd.f32 0.0, %v893
    %v895 = vpop.f32.mrf.mxu0
    %896 = vdwg.mxu0
    %v898 = vrot.slane %v894, 3
    %v899 = vrot.slane %v894, 4
    %v902 = vadd.f32 %v124, %v898
    %v903 = vadd.f32 %v129, %v899
    %v904 = vxor.u32 %v902, 2147483648
    %v905 = vxor.u32 %v903, 2147483648
    %v906 = vmul.f32 %v904, 1.442695
    %v907 = vpow.pop %v906
    %v908 = vmul.f32 %v905, 1.442695
    %v909 = vpow.pop %v908
    %v910 = vadd.f32 %v907, 1.0
    %v911 = vadd.f32 %v909, 1.0
    %v912 = vrcp.pop %v910
    %v913 = vmul.f32 1.0, %v912
    %v914 = vrcp.pop %v911
    %v915 = vmul.f32 1.0, %v914
    %v916 = vtanh.pop %v902
    %v917 = vtanh.pop %v903
    %v920 = vrot.slane %v804, 7
    %v921 = vrot.slane %v805, 7
    %v924 = vmul.f32 %v913, %v920
    %v925 = vmul.f32 %v915, %v921
    %928 = vrot.lane.b32.xlu0 %v916, 64
    %v929 = vpop.permute.xlu0 %928
    %930 = vrot.lane.b32.xlu0 %v917, 64
    %v931 = vpop.permute.xlu0 %930
    %v934 = vmul.f32 %v913, %v929
    %v935 = vmul.f32 %v915, %v931
    %938 = vrot.lane.b32.xlu0 %v934, 32
    %v939 = vpop.permute.xlu0 %938
    %940 = vrot.lane.b32.xlu0 %v935, 32
    %v941 = vpop.permute.xlu0 %940
    %v944 = vadd.f32 %v924, %v939
    %v945 = vadd.f32 %v925, %v941
    %v946 = vtanh.pop %v944
    %v947 = vtanh.pop %v945
    %950 = vrot.lane.b32.xlu0 %v946, 64
    %v951 = vpop.permute.xlu0 %950
    %952 = vrot.lane.b32.xlu0 %v947, 64
    %v953 = vpop.permute.xlu0 %952
    %v956 = vmul.f32 %v913, %v951
    %v957 = vmul.f32 %v915, %v953
    %v960 = vrot.slane %v956, 5
    %v961 = vrot.slane %v957, 4
    %v962 = vsel %vm263, %v961, %v960
    %963 = vrot.lane.b32.xlu0 %v962, 32
    %v964 = vpop.permute.xlu0 %963
    %v965 = vsel %vm132, %v964, 0
    %967 = vmatprep.subr.mxu0 0.0
    %968 = vmatpush1.msra.mxu0 0.0
    %969 = vmatprep.subr.mxu0 0.0
    %970 = vmatpush1.msra.mxu0 0.0
    %971 = vmatprep.subr.mxu0 0.0
    %972 = vmatpush1.msra.mxu0 0.0
    %973 = vmatprep.subr.mxu0 0.0
    %974 = vmatpush1.msra.mxu0 0.0
    %975 = vmatprep.subr.mxu0 0.0
    %976 = vmatpush1.msra.mxu0 0.0
    %977 = vmatprep.subr.mxu0 0.0
    %978 = vmatpush1.msra.mxu0 0.0
    %979 = vmatprep.subr.mxu0 0.0
    %980 = vmatpush1.msra.mxu0 0.0
    %981 = vmatprep.subr.mxu0 0.0
    %982 = vmatpush1.msra.mxu0 0.0
    %983 = vmatprep.subr.mxu0 0.0
    %984 = vmatpush1.msra.mxu0 0.0
    %985 = vmatprep.subr.mxu0 0.0
    %986 = vmatpush1.msra.mxu0 0.0
    %987 = vmatprep.subr.mxu0 0.0
    %988 = vmatpush1.msra.mxu0 0.0
    %989 = vmatprep.subr.mxu0 0.0
    %990 = vmatpush1.msra.mxu0 0.0
    %991 = vmatprep.subr.mxu0 0.0
    %992 = vmatpush1.msra.mxu0 %v38
    %993 = vmatprep.subr.mxu0 0.0
    %994 = vmatpush1.msra.mxu0 %v37
    %995 = vmatprep.subr.mxu0 0.0
    %996 = vmatpush1.msra.mxu0 %v36
    %997 = vmatprep.subr.mxu0 0.0
    %998 = vmatpush1.msra.mxu0 %v35
    %999 = vmatprep.subr.mxu0 0.0
    %1000 = vmatpush2.msra.mxu0 0.0
    %1001 = vmatprep.subr.mxu0 0.0
    %1002 = vmatpush2.msra.mxu0 0.0
    %1003 = vmatprep.subr.mxu0 0.0
    %1004 = vmatpush2.msra.mxu0 0.0
    %1005 = vmatprep.subr.mxu0 0.0
    %1006 = vmatpush2.msra.mxu0 0.0
    %1007 = vmatprep.subr.mxu0 0.0
    %1008 = vmatpush2.msra.mxu0 0.0
    %1009 = vmatprep.subr.mxu0 0.0
    %1010 = vmatpush2.msra.mxu0 0.0
    %1011 = vmatprep.subr.mxu0 0.0
    %1012 = vmatpush2.msra.mxu0 0.0
    %1013 = vmatprep.subr.mxu0 0.0
    %1014 = vmatpush2.msra.mxu0 0.0
    %1015 = vmatprep.subr.mxu0 0.0
    %1016 = vmatpush2.msra.mxu0 0.0
    %1017 = vmatprep.subr.mxu0 0.0
    %1018 = vmatpush2.msra.mxu0 0.0
    %1019 = vmatprep.subr.mxu0 0.0
    %1020 = vmatpush2.msra.mxu0 0.0
    %1021 = vmatprep.subr.mxu0 0.0
    %1022 = vmatpush2.msra.mxu0 0.0
    %1023 = vmatprep.subr.mxu0 0.0
    %1024 = vmatpush2.msra.mxu0 0.0
    %1025 = vmatprep.subr.mxu0 0.0
    %1026 = vmatpush2.msra.mxu0 0.0
    %1027 = vmatprep.subr.mxu0 0.0
    %1028 = vmatpush2.msra.mxu0 0.0
    %1029 = vmatprep.subr.mxu0 0.0
    %1030 = vmatpush2.msra.mxu0 0.0
    %1031 = vmatprep.mubr.f32.mxu0 0.0
    %1032 = vmatmul.mubr.f32.gmra.mxu0 %v965
    %v1033 = vpop.f32.mrf.mxu0
    %v1034 = vadd.f32 0.0, %v1033
    %v1035 = vpop.f32.mrf.mxu0
    %1036 = vdwg.mxu0
    %v1038 = vrot.slane %v1034, 2
    %v1039 = vrot.slane %v1034, 3
    %v1042 = vadd.f32 %v124, %v1038
    %v1043 = vadd.f32 %v129, %v1039
    %v1044 = vxor.u32 %v1042, 2147483648
    %v1045 = vxor.u32 %v1043, 2147483648
    %v1046 = vmul.f32 %v1044, 1.442695
    %v1047 = vpow.pop %v1046
    %v1048 = vmul.f32 %v1045, 1.442695
    %v1049 = vpow.pop %v1048
    %v1050 = vadd.f32 %v1047, 1.0
    %v1051 = vadd.f32 %v1049, 1.0
    %v1052 = vrcp.pop %v1050
    %v1053 = vmul.f32 1.0, %v1052
    %v1054 = vrcp.pop %v1051
    %v1055 = vmul.f32 1.0, %v1054
    %v1056 = vtanh.pop %v1042
    %v1057 = vtanh.pop %v1043
    %v1060 = vrot.slane %v944, 7
    %v1061 = vrot.slane %v945, 7
    %v1064 = vmul.f32 %v1053, %v1060
    %v1065 = vmul.f32 %v1055, %v1061
    %1068 = vrot.lane.b32.xlu0 %v1056, 64
    %v1069 = vpop.permute.xlu0 %1068
    %1070 = vrot.lane.b32.xlu0 %v1057, 64
    %v1071 = vpop.permute.xlu0 %1070
    %v1074 = vmul.f32 %v1053, %v1069
    %v1075 = vmul.f32 %v1055, %v1071
    %1078 = vrot.lane.b32.xlu0 %v1074, 32
    %v1079 = vpop.permute.xlu0 %1078
    %1080 = vrot.lane.b32.xlu0 %v1075, 32
    %v1081 = vpop.permute.xlu0 %1080
    %v1084 = vadd.f32 %v1064, %v1079
    %v1085 = vadd.f32 %v1065, %v1081
    %v1086 = vtanh.pop %v1084
    %v1087 = vtanh.pop %v1085
    %1090 = vrot.lane.b32.xlu0 %v1086, 64
    %v1091 = vpop.permute.xlu0 %1090
    %1092 = vrot.lane.b32.xlu0 %v1087, 64
    %v1093 = vpop.permute.xlu0 %1092
    %v1096 = vmul.f32 %v1053, %v1091
    %v1097 = vmul.f32 %v1055, %v1093
    %v1100 = vrot.slane %v1096, 6
    %v1101 = vrot.slane %v1097, 5
    %v1102 = vsel %vm263, %v1101, %v1100
    %1103 = vrot.lane.b32.xlu0 %v1102, 32
    %v1104 = vpop.permute.xlu0 %1103
    %v1105 = vsel %vm132, %v1104, 0
    %1107 = vmatprep.subr.mxu0 0.0
    %1108 = vmatpush1.msra.mxu0 0.0
    %1109 = vmatprep.subr.mxu0 0.0
    %1110 = vmatpush1.msra.mxu0 0.0
    %1111 = vmatprep.subr.mxu0 0.0
    %1112 = vmatpush1.msra.mxu0 0.0
    %1113 = vmatprep.subr.mxu0 0.0
    %1114 = vmatpush1.msra.mxu0 0.0
    %1115 = vmatprep.subr.mxu0 0.0
    %1116 = vmatpush1.msra.mxu0 0.0
    %1117 = vmatprep.subr.mxu0 0.0
    %1118 = vmatpush1.msra.mxu0 0.0
    %1119 = vmatprep.subr.mxu0 0.0
    %1120 = vmatpush1.msra.mxu0 0.0
    %1121 = vmatprep.subr.mxu0 0.0
    %1122 = vmatpush1.msra.mxu0 0.0
    %1123 = vmatprep.subr.mxu0 0.0
    %1124 = vmatpush1.msra.mxu0 0.0
    %1125 = vmatprep.subr.mxu0 0.0
    %1126 = vmatpush1.msra.mxu0 0.0
    %1127 = vmatprep.subr.mxu0 0.0
    %1128 = vmatpush1.msra.mxu0 0.0
    %1129 = vmatprep.subr.mxu0 0.0
    %1130 = vmatpush1.msra.mxu0 0.0
    %1131 = vmatprep.subr.mxu0 0.0
    %1132 = vmatpush1.msra.mxu0 %v38
    %1133 = vmatprep.subr.mxu0 0.0
    %1134 = vmatpush1.msra.mxu0 %v37
    %1135 = vmatprep.subr.mxu0 0.0
    %1136 = vmatpush1.msra.mxu0 %v36
    %1137 = vmatprep.subr.mxu0 0.0
    %1138 = vmatpush1.msra.mxu0 %v35
    %1139 = vmatprep.subr.mxu0 0.0
    %1140 = vmatpush2.msra.mxu0 0.0
    %1141 = vmatprep.subr.mxu0 0.0
    %1142 = vmatpush2.msra.mxu0 0.0
    %1143 = vmatprep.subr.mxu0 0.0
    %1144 = vmatpush2.msra.mxu0 0.0
    %1145 = vmatprep.subr.mxu0 0.0
    %1146 = vmatpush2.msra.mxu0 0.0
    %1147 = vmatprep.subr.mxu0 0.0
    %1148 = vmatpush2.msra.mxu0 0.0
    %1149 = vmatprep.subr.mxu0 0.0
    %1150 = vmatpush2.msra.mxu0 0.0
    %1151 = vmatprep.subr.mxu0 0.0
    %1152 = vmatpush2.msra.mxu0 0.0
    %1153 = vmatprep.subr.mxu0 0.0
    %1154 = vmatpush2.msra.mxu0 0.0
    %1155 = vmatprep.subr.mxu0 0.0
    %1156 = vmatpush2.msra.mxu0 0.0
    %1157 = vmatprep.subr.mxu0 0.0
    %1158 = vmatpush2.msra.mxu0 0.0
    %1159 = vmatprep.subr.mxu0 0.0
    %1160 = vmatpush2.msra.mxu0 0.0
    %1161 = vmatprep.subr.mxu0 0.0
    %1162 = vmatpush2.msra.mxu0 0.0
    %1163 = vmatprep.subr.mxu0 0.0
    %1164 = vmatpush2.msra.mxu0 0.0
    %1165 = vmatprep.subr.mxu0 0.0
    %1166 = vmatpush2.msra.mxu0 0.0
    %1167 = vmatprep.subr.mxu0 0.0
    %1168 = vmatpush2.msra.mxu0 0.0
    %1169 = vmatprep.subr.mxu0 0.0
    %1170 = vmatpush2.msra.mxu0 0.0
    %1171 = vmatprep.mubr.f32.mxu0 0.0
    %1172 = vmatmul.mubr.f32.gmra.mxu0 %v1105
    %v1173 = vpop.f32.mrf.mxu0
    %v1174 = vadd.f32 0.0, %v1173
    %v1175 = vpop.f32.mrf.mxu0
    %1176 = vdwg.mxu0
    %v1178 = vrot.slane %v1174, 1
    %v1179 = vrot.slane %v1174, 2
    %v1182 = vadd.f32 %v124, %v1178
    %v1183 = vadd.f32 %v129, %v1179
    %v1184 = vxor.u32 %v1182, 2147483648
    %v1185 = vxor.u32 %v1183, 2147483648
    %v1186 = vmul.f32 %v1184, 1.442695
    %v1187 = vpow.pop %v1186
    %v1188 = vmul.f32 %v1185, 1.442695
    %v1189 = vpow.pop %v1188
    %v1190 = vadd.f32 %v1187, 1.0
    %v1191 = vadd.f32 %v1189, 1.0
    %v1192 = vrcp.pop %v1190
    %v1193 = vmul.f32 1.0, %v1192
    %v1194 = vrcp.pop %v1191
    %v1195 = vmul.f32 1.0, %v1194
    %v1196 = vtanh.pop %v1182
    %v1197 = vtanh.pop %v1183
    %v1200 = vrot.slane %v1084, 7
    %v1201 = vrot.slane %v1085, 7
    %v1204 = vmul.f32 %v1193, %v1200
    %v1205 = vmul.f32 %v1195, %v1201
    %1208 = vrot.lane.b32.xlu0 %v1196, 64
    %v1209 = vpop.permute.xlu0 %1208
    %1210 = vrot.lane.b32.xlu0 %v1197, 64
    %v1211 = vpop.permute.xlu0 %1210
    %v1214 = vmul.f32 %v1193, %v1209
    %v1215 = vmul.f32 %v1195, %v1211
    %1218 = vrot.lane.b32.xlu0 %v1214, 32
    %v1219 = vpop.permute.xlu0 %1218
    %1220 = vrot.lane.b32.xlu0 %v1215, 32
    %v1221 = vpop.permute.xlu0 %1220
    %v1224 = vadd.f32 %v1204, %v1219
    %v1225 = vadd.f32 %v1205, %v1221
    %v1226 = vtanh.pop %v1224
    %v1227 = vtanh.pop %v1225
    %1230 = vrot.lane.b32.xlu0 %v1226, 64
    %v1231 = vpop.permute.xlu0 %1230
    %1232 = vrot.lane.b32.xlu0 %v1227, 64
    %v1233 = vpop.permute.xlu0 %1232
    %v1236 = vmul.f32 %v1193, %v1231
    %v1237 = vmul.f32 %v1195, %v1233
    %v1240 = vrot.slane %v1237, 7
    %1241 = vrot.lane.b32.xlu0 %v1236, 32
    %v1242 = vpop.permute.xlu0 %1241
    %1243 = vrot.lane.b32.xlu0 %v1240, 32
    %v1244 = vpop.permute.xlu0 %1243
    %vm1247 = vcmask 261127
    %1248 = vst.msk [vmem:[#allocation5 - $0x7] sm:$0x80] %vm1247, %v1242
    %vm1249 = vcmask 253952
    %1250 = vst.msk [vmem:[#allocation5 + $0x1] sm:$0x1] %vm1249, %v1244
    // Predicated region
    $region22: #{keras_like_lstm.1} parent=1 // pred_check
      _
    $region23: #{keras_like_lstm.1} parent=1 // pred_check_branch
      %1252 = sbr.rel (0) target = $region25
    $region24: #{keras_like_lstm.1} parent=1 // pred_region
      %s1254 = ssub.s32 32, 32
      %1255 = vsyncadd [#allocation4], %s1254
      %s1257 = sshll.u32 [#allocation5], 4
      %s1258 = int_to_ptr.vmem [resolvable:$true] %s1257
      %1260 = dma.vmem_to_hbm [thread:$0]  %s1258, 32, %s4, [#allocation4]
    $region25: #{keras_like_lstm.1} parent=1 // pred_fallthru
      _
    // Predicated region
    $region26: #{keras_like_lstm.1} parent=1 // pred_check
      _
    $region27: #{keras_like_lstm.1} parent=1 // pred_check_branch
      %1262 = sbr.rel (0) target = $region29
    $region28: #{keras_like_lstm.1} parent=1 // pred_region
      %1263 = dma.done [#allocation4], 32
    $region29: #{keras_like_lstm.1} parent=1 // pred_fallthru
      _
    %1264 = vsyncpa [#allocation3], 1
    %1265 = vsyncpa [#allocation4], 1

</llo_original>
